<compile_context>
chip_gen: v7x
topology: tpu7x:2x2x1
jax: 0.10.0
libtpu: 0.0.40
codegen_flags: <defaults>
</compile_context>

<pallas_src>
import functools
import math

import jax
import jax.numpy as jnp
from jax.experimental import pallas as pl
from jax.experimental.pallas import tpu as pltpu


def _build_pe(d_model: int, max_len: int) -> jnp.ndarray:
    """Deterministically build the sinusoidal table, shape (max_len, d_model)."""
    position = jnp.arange(0, max_len, dtype=jnp.float32)[:, None]        # (max_len, 1)
    div_term = jnp.exp(
        jnp.arange(0, d_model, 2, dtype=jnp.float32) * (-math.log(10000.0) / d_model)
    )                                                                     # (d_model//2,)
    angles = position * div_term                                          # (max_len, d_model//2)
    pe = jnp.zeros((max_len, d_model), dtype=jnp.float32)
    pe = pe.at[:, 0::2].set(jnp.sin(angles))
    pe = pe.at[:, 1::2].set(jnp.cos(angles))
    return pe


def _pos_enc_kernel(x_ref, pe_ref, o_ref, *, batch: int):
    # x_ref : (ts, B*D) VMEM tile -- lane-dense, x[s, b*D + d] == x[s, b, d]
    # pe_ref: (ts, D)   VMEM tile
    # Broadcast pe over the batch axis inside VMEM: [pe_row, pe_row, ..., B times]
    pe_row = jnp.tile(pe_ref[...].astype(x_ref.dtype), (1, batch))       # (ts, B*D)
    o_ref[...] = (x_ref[...] + pe_row).astype(o_ref.dtype)


def _pick_seq_tile(S: int, row_bytes: int, target_block_bytes: int = 2 << 20) -> int:
    """Pick a sublane-aligned seq tile so one (x or out) block is ~target bytes."""
    tile = max(1, target_block_bytes // max(row_bytes, 1))
    if tile >= S:
        return S                       # whole seq fits comfortably in one block
    tile = max(8, (tile // 8) * 8)     # keep second-to-last block dim a multiple of 8
    return min(tile, S)


def positional_encoding(
    x: jnp.ndarray,
    pe: jnp.ndarray,
    *,
    seq_tile: int | None = None,
    force_pallas: bool = False,
):
    """x: (S, B, D); pe: (max_len, D). Returns x + pe[:S, None, :] (dropout = eval identity)."""
    S, B, D = x.shape
    pe_s = pe[:S].astype(x.dtype)                      # (S, D) -- static slice, plain-JAX glue

    itemsize = jnp.dtype(x.dtype).itemsize
    total_bytes = S * B * D * itemsize
    if not force_pallas and total_bytes < (256 << 10):
        # Tiny problem: kernel launch + pipeline setup dwarfs the add; let XLA fuse it.
        return x + pe_s[:, None, :]

    W = B * D
    x2 = x.reshape(S, W)                               # free reshape on row-major (S, B, D)

    if seq_tile is None:
        seq_tile = _pick_seq_tile(S, W * itemsize)
    seq_tile = min(seq_tile, S)
    if seq_tile != S and seq_tile % 8 != 0:
        seq_tile = max(8, (seq_tile // 8) * 8)

    grid = (pl.cdiv(S, seq_tile),)                     # ragged last tile handled by clipping

    kernel = functools.partial(_pos_enc_kernel, batch=B)

    out2 = pl.pallas_call(
        kernel,
        out_shape=jax.ShapeDtypeStruct((S, W), x.dtype),
        grid_spec=pltpu.PrefetchScalarGridSpec(
            num_scalar_prefetch=0,
            grid=grid,
            in_specs=[
                pl.BlockSpec((seq_tile, W), lambda i: (i, 0)),   # x slab (lane-dense)
                pl.BlockSpec((seq_tile, D), lambda i: (i, 0)),   # pe block (broadcast in-kernel)
            ],
            out_specs=pl.BlockSpec((seq_tile, W), lambda i: (i, 0)),
        ),
        compiler_params=pltpu.CompilerParams(
            dimension_semantics=("parallel",),          # shards seq tiles across TCs (v7x)
            vmem_limit_bytes=32 << 20,                  # ~2 MiB blocks x double buffers << limit
        ),
    )(x2, pe_s)

    return out2.reshape(S, B, D)


if __name__ == "__main__":
    d_model = 32
    max_len = 5000   # module default
    key = jax.random.PRNGKey(0)
    pe = _build_pe(d_model, max_len)

    # --- demo shape consistent with the module (seq=8, batch=2, d_model=32) ---
    seq, batch = 8, 2
    x = jax.random.normal(key, (seq, batch, d_model), dtype=jnp.float32)
    out = positional_encoding(x, pe, force_pallas=True)   # force Pallas path for the tiny demo
    out = jax.block_until_ready(out)
    ref = x + pe[:seq][:, None, :]
    assert out.shape == (seq, batch, d_model)
    assert jnp.allclose(out, ref, atol=1e-6), "mismatch vs reference (small shape)"

    # --- exercise the multi-tile / ragged-last-tile path ---
    seq2, batch2 = 40, 2
    key2 = jax.random.PRNGKey(0)
    x2 = jax.random.normal(key2, (seq2, batch2, d_model), dtype=jnp.float32)
    out2 = positional_encoding(x2, pe, seq_tile=16, force_pallas=True)  # grid = cdiv(40,16) = 3
    out2 = jax.block_until_ready(out2)
    ref2 = x2 + pe[:seq2][:, None, :]
    assert out2.shape == (seq2, batch2, d_model)
    assert jnp.allclose(out2, ref2, atol=1e-6), "mismatch vs reference (ragged tiles)"

    # TODO(synk): nn.Dropout is identity in this inference module; training-mode dropout
    # (pltpu.prng_seed + stateful_bernoulli) intentionally not implemented.
    print("KERNEL_OK")
</pallas_src>

<mosaic_0001>
module attributes {stable_mosaic.version = 11 : i64} {
  func.func @_pos_enc_kernel(%arg0: i32, %arg1: memref<8x64xf32, #tpu.memory_space<vmem>>, %arg2: memref<8x32xf32, #tpu.memory_space<vmem>>, %arg3: memref<8x64xf32, #tpu.memory_space<vmem>>) attributes {dimension_semantics = [#tpu.dimension_semantics<parallel>], iteration_bounds = array<i64: 1>, scalar_prefetch = 0 : i64, scratch_operands = 0 : i64, tpu.core_type = #tpu.core_type<tc>, window_params = [{transform_indices = @transform_0, window_bounds = array<i64: 8, 64>}, {transform_indices = @transform_1, window_bounds = array<i64: 8, 32>}, {transform_indices = @transform_2, window_bounds = array<i64: 8, 64>}]} {
    %c0 = arith.constant 0 : index
    %c0_0 = arith.constant 0 : index
    %0 = vector.load %arg2[%c0, %c0_0] : memref<8x32xf32, #tpu.memory_space<vmem>>, vector<8x32xf32>
    %1 = tpu.concatenate %0, %0 in 1 : vector<8x32xf32>, vector<8x32xf32> -> vector<8x64xf32>
    %c0_1 = arith.constant 0 : index
    %c0_2 = arith.constant 0 : index
    %2 = vector.load %arg1[%c0_1, %c0_2] : memref<8x64xf32, #tpu.memory_space<vmem>>, vector<8x64xf32>
    %3 = arith.addf %2, %1 : vector<8x64xf32>
    %c0_3 = arith.constant 0 : index
    %c0_4 = arith.constant 0 : index
    %4 = vector.load %arg3[%c0_3, %c0_4] : memref<8x64xf32, #tpu.memory_space<vmem>>, vector<8x64xf32>
    tpu.vector_store %arg3[%c0_3, %c0_4], %3 {strides = array<i32>} : memref<8x64xf32, #tpu.memory_space<vmem>>, vector<8x64xf32>,
    return
  }
  func.func @transform_0(%arg0: i32) -> (i32, i32) {
    %c0_i32 = arith.constant 0 : i32
    %c0_i32_0 = arith.constant 0 : i32
    return %arg0, %c0_i32 : i32, i32
  }
  func.func @transform_1(%arg0: i32) -> (i32, i32) {
    %c0_i32 = arith.constant 0 : i32
    %c0_i32_0 = arith.constant 0 : i32
    return %arg0, %c0_i32 : i32, i32
  }
  func.func @transform_2(%arg0: i32) -> (i32, i32) {
    %c0_i32 = arith.constant 0 : i32
    %c0_i32_0 = arith.constant 0 : i32
    return %arg0, %c0_i32 : i32, i32
  }
}

</mosaic_0001>

<llo_original>
// kernel: tpu_custom_call.1
$region0: #{tpu_custom_call.1}
  #allocation0 [shape = 'u32[]', space=smem, size = 0x4, offset = 0x4, fixed_abs, tag = 'smem constant byte address 0x4 - core index']
  #allocation1 [shape = 'u32[144,128]{1,0:T(1,128)}', space=vmem, size = 0x12000, scoped, tag = 'internal scratch']
  %s0 = inlined_call_operand.hbm [shape: f32[8,64], index: 0, kind: input, shape index: {}]
  %s1 = inlined_call_operand.hbm [shape: f32[8,32], index: 1, kind: input, shape index: {}]
  %s2 = inlined_call_operand.hbm [shape: f32[8,64], index: 2, kind: output, shape index: {}]
  %s3 = sld [smem:[#allocation0]]
  $region26: #{tpu_custom_call.1} parent=0
    _
  %s5 = ssub.s32 1, %s3
  %s6 = scalar_select 0, %s5, %s3
  $region1: #{tpu_custom_call.1} parent=0
    #allocation2 [shape = 'u8[4096]{0}', space=vmem, size = 0x1000, scoped, tag = 'input window, operand 0, single buffered']
    #allocation3 [shape = 's32[1]{0}', space=sflag, size = 0x4, scoped, tag = 'scoped memory for tpu_custom_call.1']
    #allocation4 [shape = 's32[1]{0}', space=sflag, size = 0x4, scoped, tag = 'scoped memory for tpu_custom_call.1']
    #allocation5 [shape = 'u8[4096]{0}', space=vmem, size = 0x1000, scoped, tag = 'input window, operand 1, single buffered']
    #allocation6 [shape = 's32[1]{0}', space=sflag, size = 0x4, scoped, tag = 'scoped memory for tpu_custom_call.1']
    #allocation7 [shape = 'u8[4096]{0}', space=vmem, size = 0x1000, scoped, tag = 'output window, operand 0, single buffered']
    %7 = vsyncpa [#allocation3], 0
    %8 = vsyncpa [#allocation6], 0
    %9 = vsyncpa [#allocation4], 0
    // Predicated region
    $region2: #{tpu_custom_call.1} parent=1 // pred_check
      _
    $region3: #{tpu_custom_call.1} parent=1 // pred_check_branch
      %11 = sbr.rel (0) target = $region5
    $region4: #{tpu_custom_call.1} parent=1 // pred_region
      %s13 = ssub.s32 128, 128
      %14 = vsyncadd [#allocation3], %s13
      %s16 = sshll.u32 [#allocation2], 4
      %s17 = int_to_ptr.vmem [resolvable:$true] %s16
      %19 = dma.hbm_to_vmem [thread:$0]  %s0, 128, %s17, [#allocation3]
    $region5: #{tpu_custom_call.1} parent=1 // pred_fallthru
      _
    // Predicated region
    $region6: #{tpu_custom_call.1} parent=1 // pred_check
      _
    $region7: #{tpu_custom_call.1} parent=1 // pred_check_branch
      %21 = sbr.rel (0) target = $region9
    $region8: #{tpu_custom_call.1} parent=1 // pred_region
      %s23 = ssub.s32 128, 128
      %24 = vsyncadd [#allocation6], %s23
      %s26 = sshll.u32 [#allocation5], 4
      %s27 = int_to_ptr.vmem [resolvable:$true] %s26
      %29 = dma.hbm_to_vmem [thread:$0]  %s1, 128, %s27, [#allocation6]
    $region9: #{tpu_custom_call.1} parent=1 // pred_fallthru
      _
    // Predicated region
    $region10: #{tpu_custom_call.1} parent=1 // pred_check
      _
    $region11: #{tpu_custom_call.1} parent=1 // pred_check_branch
      %31 = sbr.rel (0) target = $region13
    $region12: #{tpu_custom_call.1} parent=1 // pred_region
      %32 = dma.done [#allocation3], 128
    $region13: #{tpu_custom_call.1} parent=1 // pred_fallthru
      _
    // Predicated region
    $region14: #{tpu_custom_call.1} parent=1 // pred_check
      _
    $region15: #{tpu_custom_call.1} parent=1 // pred_check_branch
      %34 = sbr.rel (0) target = $region17
    $region16: #{tpu_custom_call.1} parent=1 // pred_region
      %35 = dma.done [#allocation6], 128
    $region17: #{tpu_custom_call.1} parent=1 // pred_fallthru
      _
    %v36 = vld [vmem:[#allocation5] sm:$0xff]
    %38 = vrot.lane.b32.xlu0 %v36, 32
    %v39 = vpop.permute.xlu0 %38
    %vm41 = vcmask 261120
    %v42 = vsel %vm41, %v36, %v39
    %v43 = vld [vmem:[#allocation2] sm:$0xff]
    %v44 = vadd.f32 %v43, %v42
    %vm45 = vcmask 523264
    %46 = vst.msk [vmem:[#allocation7] sm:$0xff] %vm45, %v44
    // Predicated region
    $region18: #{tpu_custom_call.1} parent=1 // pred_check
      _
    $region19: #{tpu_custom_call.1} parent=1 // pred_check_branch
      %48 = sbr.rel (0) target = $region21
    $region20: #{tpu_custom_call.1} parent=1 // pred_region
      %s50 = ssub.s32 128, 128
      %51 = vsyncadd [#allocation4], %s50
      %s53 = sshll.u32 [#allocation7], 4
      %s54 = int_to_ptr.vmem [resolvable:$true] %s53
      %56 = dma.vmem_to_hbm [thread:$0]  %s54, 128, %s2, [#allocation4]
    $region21: #{tpu_custom_call.1} parent=1 // pred_fallthru
      _
    // Predicated region
    $region22: #{tpu_custom_call.1} parent=1 // pred_check
      _
    $region23: #{tpu_custom_call.1} parent=1 // pred_check_branch
      %58 = sbr.rel (0) target = $region25
    $region24: #{tpu_custom_call.1} parent=1 // pred_region
      %59 = dma.done [#allocation4], 128
    $region25: #{tpu_custom_call.1} parent=1 // pred_fallthru
      _
    %60 = vsyncpa [#allocation3], 1
    %61 = vsyncpa [#allocation6], 1
    %62 = vsyncpa [#allocation4], 1

</llo_original>
